<compile_context>
chip_gen: v7x
topology: tpu7x:2x2x1
jax: 0.10.0
libtpu: 0.0.40
codegen_flags: <defaults>
</compile_context>

<pallas_src>
import jax
import jax.numpy as jnp
from jax.experimental import pallas as pl
from jax.experimental.pallas import tpu as pltpu


_TARGET_BLOCK_BYTES = 2 * 1024 * 1024   # ~2 MiB input block -> ~85%+ of HBM roofline
_MAX_BATCH_TILE = 4096                  # bounds VMEM use of the (tb, 1) output buffer


def _round_up(x, m):
    return ((x + m - 1) // m) * m


def _choose_batch_tile(batch, row_bytes):
    """Pick a batch tile so one input block is ~_TARGET_BLOCK_BYTES."""
    cap = max(8, _TARGET_BLOCK_BYTES // max(row_bytes, 1))
    b8 = _round_up(batch, 8)
    if b8 <= cap:
        tb = b8 if b8 <= 128 else _round_up(b8, 128)
    elif cap >= 128:
        tb = (cap // 128) * 128
    else:
        tb = max(8, (cap // 8) * 8)
    return min(tb, _MAX_BATCH_TILE)


def _pick_row_chunk(tb):
    """Largest chunk of rows (<=128, multiple of 8) that divides tb."""
    if tb <= 128:
        return tb
    for r in range(128, 0, -8):
        if tb % r == 0:
            return r
    return 8   # unreachable: tb is always a multiple of 8


def _fold_fields(v, num_fields, embed):
    """Sum `num_fields` adjacent lane-groups of width `embed`: (R, F*D) -> (R, D).

    Pairwise halving keeps most adds lane-dense (the first fold is vreg-aligned
    when F*D is a multiple of 256); an odd field count peels the trailing field.
    """
    f = num_fields
    extra = None
    while f > 1:
        if f % 2:
            tail = v[:, (f - 1) * embed: f * embed]
            extra = tail if extra is None else extra + tail
            f -= 1
            v = v[:, : f * embed]
        half = (f // 2) * embed
        v = v[:, :half] + v[:, half:]
        f //= 2
    if extra is not None:
        v = v + extra
    return v


def _make_fm_kernel(field_size, embed_size, row_chunk):
    F, D, R = field_size, embed_size, row_chunk

    def kernel(x_ref, o_ref):
        # x_ref: (tb, F*D) lane-dense block in VMEM; o_ref: (tb, 1) float32.
        n_chunks = x_ref.shape[0] // R

        def body(c, carry):
            r0 = pl.multiple_of(c * R, R)
            x = x_ref[pl.ds(r0, R), :].astype(jnp.float32)        # (R, F*D), f32 per chunk only
            s = _fold_fields(x, F, D)                              # (R, D)  sum_f x
            ssd = _fold_fields(x * x, F, D)                        # (R, D)  sum_f x^2
            cross = 0.5 * jnp.sum(s * s - ssd, axis=-1, keepdims=True)   # (R, 1)
            o_ref[pl.ds(r0, R), :] = cross.astype(o_ref.dtype)
            return carry

        jax.lax.fori_loop(0, n_chunks, body, 0)

    return kernel


def fm_forward(x, *, batch_tile=None):
    """FM second-order cross term. x: (B, F, D) -> (B, 1) float32."""
    B, F, D = x.shape
    FD = F * D
    x2d = x.reshape(B, FD)                       # merging contiguous trailing dims is free
    row_bytes = FD * x2d.dtype.itemsize

    if batch_tile is None:
        tb = _choose_batch_tile(B, row_bytes)
    else:
        tb = max(8, _round_up(int(batch_tile), 8))

    padded_B = _round_up(B, tb)
    if padded_B != B:
        # zero rows contribute exactly 0 to the cross term; sliced off below
        x2d = jnp.pad(x2d, ((0, padded_B - B), (0, 0)))

    kernel = _make_fm_kernel(F, D, _pick_row_chunk(tb))

    out = pl.pallas_call(
        kernel,
        out_shape=jax.ShapeDtypeStruct((padded_B, 1), jnp.float32),
        grid=(padded_B // tb,),
        in_specs=[pl.BlockSpec((tb, FD), lambda i: (i, 0))],
        out_specs=pl.BlockSpec((tb, 1), lambda i: (i, 0)),
        compiler_params=pltpu.CompilerParams(
            dimension_semantics=("parallel",),          # megacore sharding on v7x
            vmem_limit_bytes=32 * 1024 * 1024,          # headroom on v5e (16 MiB default)
        ),
    )(x2d)
    return out[:B]


def fm_reference(x):
    # Pure-JAX reference mirroring the PyTorch forward exactly (f32 math).
    x = x.astype(jnp.float32)
    square_of_sum = jnp.square(jnp.sum(x, axis=1, keepdims=True))   # (B, 1, D)
    sum_of_square = jnp.sum(x * x, axis=1, keepdims=True)           # (B, 1, D)
    cross_term = square_of_sum - sum_of_square
    return 0.5 * jnp.sum(cross_term, axis=2)                        # (B, 1)


if __name__ == "__main__":
    key = jax.random.PRNGKey(0)

    # Test 1: small f32 case (batch=8, field_size=8, embedding_size=32).
    B, F, D = 8, 8, 32
    x = jax.random.normal(key, (B, F, D), dtype=jnp.float32)
    out = jax.block_until_ready(fm_forward(x))
    ref = fm_reference(x)
    assert out.shape == (B, 1), out.shape
    assert jnp.allclose(out, ref, atol=1e-3, rtol=1e-4), (out, ref)

    # Test 2: ragged batch + bf16 input (exercises padding, multi-chunk loop,
    # and the f32 accumulation path).
    k2 = jax.random.PRNGKey(1)
    B2 = 300
    x2 = jax.random.normal(k2, (B2, F, D), dtype=jnp.float32).astype(jnp.bfloat16)
    out2 = jax.block_until_ready(fm_forward(x2))
    ref2 = fm_reference(x2)
    assert out2.shape == (B2, 1), out2.shape
    assert jnp.allclose(out2, ref2, atol=5e-3, rtol=1e-3), (out2[:4], ref2[:4])

    print("KERNEL_OK")
</pallas_src>

<mosaic_0001>
module attributes {stable_mosaic.version = 11 : i64} {
  func.func @kernel(%arg0: i32, %arg1: memref<8x256xf32, #tpu.memory_space<vmem>>, %arg2: memref<8x1xf32, #tpu.memory_space<vmem>>) attributes {dimension_semantics = [#tpu.dimension_semantics<parallel>], iteration_bounds = array<i64: 1>, scalar_prefetch = 0 : i64, scratch_operands = 0 : i64, tpu.core_type = #tpu.core_type<tc>, window_params = [{transform_indices = @transform_0, window_bounds = array<i64: 8, 256>}, {transform_indices = @transform_1, window_bounds = array<i64: 8, 1>}]} {
    %c0_i32 = arith.constant 0 : i32
    %c8_i32 = arith.constant 8 : i32
    %0 = arith.muli %c0_i32, %c8_i32 : i32
    %1 = tpu.assume_multiple %0, 8 : i32
    %2 = arith.index_cast %1 : i32 to index
    %c0 = arith.constant 0 : index
    %3 = vector.load %arg1[%2, %c0] : memref<8x256xf32, #tpu.memory_space<vmem>>, vector<8x256xf32>
    %4 = vector.extract_strided_slice %3 {offsets = [0, 0], sizes = [8, 128], strides = [1, 1]} : vector<8x256xf32> to vector<8x128xf32>
    %5 = vector.extract_strided_slice %3 {offsets = [0, 128], sizes = [8, 128], strides = [1, 1]} : vector<8x256xf32> to vector<8x128xf32>
    %6 = arith.addf %4, %5 : vector<8x128xf32>
    %7 = vector.extract_strided_slice %6 {offsets = [0, 0], sizes = [8, 64], strides = [1, 1]} : vector<8x128xf32> to vector<8x64xf32>
    %8 = vector.extract_strided_slice %6 {offsets = [0, 64], sizes = [8, 64], strides = [1, 1]} : vector<8x128xf32> to vector<8x64xf32>
    %9 = arith.addf %7, %8 : vector<8x64xf32>
    %10 = vector.extract_strided_slice %9 {offsets = [0, 0], sizes = [8, 32], strides = [1, 1]} : vector<8x64xf32> to vector<8x32xf32>
    %11 = vector.extract_strided_slice %9 {offsets = [0, 32], sizes = [8, 32], strides = [1, 1]} : vector<8x64xf32> to vector<8x32xf32>
    %12 = arith.addf %10, %11 : vector<8x32xf32>
    %13 = arith.mulf %3, %3 : vector<8x256xf32>
    %14 = vector.extract_strided_slice %13 {offsets = [0, 0], sizes = [8, 128], strides = [1, 1]} : vector<8x256xf32> to vector<8x128xf32>
    %15 = vector.extract_strided_slice %13 {offsets = [0, 128], sizes = [8, 128], strides = [1, 1]} : vector<8x256xf32> to vector<8x128xf32>
    %16 = arith.addf %14, %15 : vector<8x128xf32>
    %17 = vector.extract_strided_slice %16 {offsets = [0, 0], sizes = [8, 64], strides = [1, 1]} : vector<8x128xf32> to vector<8x64xf32>
    %18 = vector.extract_strided_slice %16 {offsets = [0, 64], sizes = [8, 64], strides = [1, 1]} : vector<8x128xf32> to vector<8x64xf32>
    %19 = arith.addf %17, %18 : vector<8x64xf32>
    %20 = vector.extract_strided_slice %19 {offsets = [0, 0], sizes = [8, 32], strides = [1, 1]} : vector<8x64xf32> to vector<8x32xf32>
    %21 = vector.extract_strided_slice %19 {offsets = [0, 32], sizes = [8, 32], strides = [1, 1]} : vector<8x64xf32> to vector<8x32xf32>
    %22 = arith.addf %20, %21 : vector<8x32xf32>
    %23 = arith.mulf %12, %12 : vector<8x32xf32>
    %24 = arith.subf %23, %22 : vector<8x32xf32>
    %cst = arith.constant dense<0.000000e+00> : vector<8xf32>
    %25 = vector.multi_reduction <add>, %24, %cst [1] : vector<8x32xf32> to vector<8xf32>
    %26 = vector.shape_cast %25 : vector<8xf32> to vector<8x1xf32>
    %cst_0 = arith.constant 5.000000e-01 : f32
    %27 = vector.broadcast %cst_0 : f32 to vector<8x1xf32>
    %28 = arith.mulf %27, %26 : vector<8x1xf32>
    %29 = arith.index_cast %1 : i32 to index
    %c0_1 = arith.constant 0 : index
    %30 = vector.load %arg2[%29, %c0_1] : memref<8x1xf32, #tpu.memory_space<vmem>>, vector<8x1xf32>
    tpu.vector_store %arg2[%29, %c0_1], %28 {strides = array<i32>} : memref<8x1xf32, #tpu.memory_space<vmem>>, vector<8x1xf32>,
    %c1_i32 = arith.constant 1 : i32
    return
  }
  func.func @transform_0(%arg0: i32) -> (i32, i32) {
    %c0_i32 = arith.constant 0 : i32
    %c0_i32_0 = arith.constant 0 : i32
    return %arg0, %c0_i32 : i32, i32
  }
  func.func @transform_1(%arg0: i32) -> (i32, i32) {
    %c0_i32 = arith.constant 0 : i32
    %c0_i32_0 = arith.constant 0 : i32
    return %arg0, %c0_i32 : i32, i32
  }
}

</mosaic_0001>

<llo_original>
// kernel: tpu_custom_call.1
$region0: #{tpu_custom_call.1}
  #allocation0 [shape = 'u32[]', space=smem, size = 0x4, offset = 0x4, fixed_abs, tag = 'smem constant byte address 0x4 - core index']
  #allocation1 [shape = 'u32[144,128]{1,0:T(1,128)}', space=vmem, size = 0x12000, scoped, tag = 'internal scratch']
  %s0 = inlined_call_operand.hbm [shape: f32[8,256], index: 0, kind: input, shape index: {}]
  %s1 = inlined_call_operand.vmem [shape: f32[8,1], index: 1, kind: output, shape index: {}]
  %s2 = sld [smem:[#allocation0]]
  $region18: #{tpu_custom_call.1} parent=0
    _
  %s4 = ssub.s32 1, %s2
  %s5 = scalar_select 0, %s4, %s2
  $region1: #{tpu_custom_call.1} parent=0
    #allocation2 [shape = 'u8[8192]{0}', space=vmem, size = 0x2000, scoped, tag = 'input window, operand 0, single buffered']
    #allocation3 [shape = 's32[1]{0}', space=sflag, size = 0x4, scoped, tag = 'scoped memory for tpu_custom_call.1']
    %6 = vsyncpa [#allocation3], 0
    // Predicated region
    $region2: #{tpu_custom_call.1} parent=1 // pred_check
      _
    $region3: #{tpu_custom_call.1} parent=1 // pred_check_branch
      %8 = sbr.rel (0) target = $region5
    $region4: #{tpu_custom_call.1} parent=1 // pred_region
      %s10 = ssub.s32 256, 256
      %11 = vsyncadd [#allocation3], %s10
      %s13 = sshll.u32 [#allocation2], 4
      %s14 = int_to_ptr.vmem [resolvable:$true] %s13
      %16 = dma.hbm_to_vmem [thread:$0]  %s0, 256, %s14, [#allocation3]
    $region5: #{tpu_custom_call.1} parent=1 // pred_fallthru
      _
    // Predicated region
    $region6: #{tpu_custom_call.1} parent=1 // pred_check
      _
    $region7: #{tpu_custom_call.1} parent=1 // pred_check_branch
      %18 = sbr.rel (0) target = $region9
    $region8: #{tpu_custom_call.1} parent=1 // pred_region
      %19 = dma.done [#allocation3], 256
    $region9: #{tpu_custom_call.1} parent=1 // pred_fallthru
      _
    %s20 = smul.u32 0, 2
    %s21 = smul.addr %s20, 8
    %s22 = scalar_lea.vmem [#allocation2], %s21
    %v23 = vld [vmem:[%s22] sm:$0xff]
    %v24 = vld [vmem:[%s22 + $0x8] sm:$0xff]
    %v25 = vadd.f32 %v23, %v24
    %27 = vrot.lane.b32.xlu0 %v25, 64
    %v28 = vpop.permute.xlu0 %27
    %v30 = vadd.f32 %v25, %v28
    %32 = vrot.lane.b32.xlu0 %v30, 96
    %v33 = vpop.permute.xlu0 %32
    %v35 = vadd.f32 %v30, %v33
    %v36 = vmul.f32 %v23, %v23
    %v37 = vmul.f32 %v24, %v24
    %v38 = vadd.f32 %v36, %v37
    %40 = vrot.lane.b32.xlu0 %v38, 64
    %v41 = vpop.permute.xlu0 %40
    %v43 = vadd.f32 %v38, %v41
    %45 = vrot.lane.b32.xlu0 %v43, 96
    %v46 = vpop.permute.xlu0 %45
    %v48 = vadd.f32 %v43, %v46
    %v49 = vmul.f32 %v35, %v35
    %v50 = vsub.f32 %v49, %v48
    %vm51 = vcmask 261120
    %v52 = vsel %vm51, %v50, 0.0
    %53 = vadd.xlane.f32.xlu0 %v52
    %v54 = vpop.xlane.xlu0 %53
    %v55 = vmul.f32 %v54, 0.5
    %vm56 = vcmask 7168
    %57 = vst.msk [vmem:[%s1] sm:$0xff] %vm56, %v55
    // Predicated region
    $region10: #{tpu_custom_call.1} parent=1 // pred_check
      _
    $region11: #{tpu_custom_call.1} parent=1 // pred_check_branch
      %59 = sbr.rel (0) target = $region13
    $region12: #{tpu_custom_call.1} parent=1 // pred_region
      _
    $region13: #{tpu_custom_call.1} parent=1 // pred_fallthru
      _
    // Predicated region
    $region14: #{tpu_custom_call.1} parent=1 // pred_check
      _
    $region15: #{tpu_custom_call.1} parent=1 // pred_check_branch
      %61 = sbr.rel (0) target = $region17
    $region16: #{tpu_custom_call.1} parent=1 // pred_region
      _
    $region17: #{tpu_custom_call.1} parent=1 // pred_fallthru
      _
    %62 = vsyncpa [#allocation3], 1

</llo_original>
